<compile_context>
chip_gen: v5e
topology: v5e:2x2
jax: 0.10.0
libtpu: 0.0.40
codegen_flags: <defaults>
</compile_context>

<pallas_src>
import jax
import jax.numpy as jnp
from jax.experimental import pallas as pl
from jax.experimental.pallas import tpu as pltpu


def _zpool_kernel(x_ref, o_ref):
    # x_ref block: (nb, C, tS); o_ref block: (nb, 2, tS)
    x = x_ref[...]
    c = x.shape[1]
    mx = jnp.max(x, axis=1, keepdims=True)                        # (nb, 1, tS)
    sm = jnp.sum(x.astype(jnp.float32), axis=1, keepdims=True)    # (nb, 1, tS), f32 accum
    mean = sm * (1.0 / c)                                         # 1/C is a constant
    o_ref[:, 0:1, :] = mx.astype(o_ref.dtype)
    o_ref[:, 1:2, :] = mean.astype(o_ref.dtype)


def _spatial_tile(S, C, itemsize, target_bytes):
    """Pick a lane-dense spatial tile (multiple of 128, ~target_bytes per input buffer)."""
    per_lane_bytes = max(1, C * itemsize)
    max_ts = max(128, (target_bytes // per_lane_bytes) // 128 * 128)
    if S <= max_ts:
        return int(S)          # full extent: always a legal block dim
    return int(max_ts)         # multiple of 128 (< S); partial last block is fine


def _batch_fold(N, C, S, tS, itemsize, target_bytes):
    """If one block covers all of S and is tiny, fold batches to amortize grid overhead."""
    if tS != S:
        return 1
    block_bytes = max(1, C * S * itemsize)
    nb = int(min(N, max(1, target_bytes // block_bytes)))
    while N % nb != 0:         # keep full blocks along the batch axis
        nb -= 1
    return nb


def zpool(x, *, target_block_bytes=4 << 20):
    """ZPool over dim=1 for NCHW input. Returns (N, 2, H, W)."""
    N, C, H, W = x.shape
    S = H * W
    itemsize = jnp.dtype(x.dtype).itemsize

    tS = _spatial_tile(S, C, itemsize, target_block_bytes)
    nb = _batch_fold(N, C, S, tS, itemsize, target_block_bytes)
    grid = (pl.cdiv(N, nb), pl.cdiv(S, tS))

    xf = x.reshape(N, C, S)    # lane axis = flattened H*W (dense stores)

    out = pl.pallas_call(
        _zpool_kernel,
        out_shape=jax.ShapeDtypeStruct((N, 2, S), x.dtype),
        grid_spec=pltpu.PrefetchScalarGridSpec(
            num_scalar_prefetch=0,
            grid=grid,
            in_specs=[pl.BlockSpec((nb, C, tS), lambda b, s: (b, 0, s))],
            out_specs=pl.BlockSpec((nb, 2, tS), lambda b, s: (b, 0, s)),
        ),
        compiler_params=pltpu.CompilerParams(
            # batch and spatial tiles are independent -> shard across TensorCores
            dimension_semantics=("parallel", "parallel")),
    )(xf)

    return out.reshape(N, 2, H, W)


def zpool_reference(x):
    mx = jnp.max(x, axis=1, keepdims=True)
    mn = jnp.mean(x.astype(jnp.float32), axis=1, keepdims=True).astype(x.dtype)
    return jnp.concatenate([mx, mn], axis=1)


if __name__ == "__main__":
    key = jax.random.PRNGKey(0)
    x = jax.random.normal(key, (2, 4, 16, 16), dtype=jnp.float32)

    out = zpool(x)
    jax.block_until_ready(out)

    ref = zpool_reference(x)
    assert out.shape == (2, 2, 16, 16), out.shape
    assert jnp.allclose(out, ref, atol=1e-5, rtol=1e-5), "mismatch vs reference"

    print("KERNEL_OK")
</pallas_src>

<mosaic_0001>
module attributes {stable_mosaic.version = 11 : i64} {
  func.func @_zpool_kernel(%arg0: i32, %arg1: i32, %arg2: memref<2x4x256xf32, #tpu.memory_space<vmem>>, %arg3: memref<2x2x256xf32, #tpu.memory_space<vmem>>) attributes {dimension_semantics = [#tpu.dimension_semantics<parallel>, #tpu.dimension_semantics<parallel>], iteration_bounds = array<i64: 1, 1>, scalar_prefetch = 0 : i64, scratch_operands = 0 : i64, tpu.core_type = #tpu.core_type<tc>, window_params = [{transform_indices = @transform_0, window_bounds = array<i64: 2, 4, 256>}, {transform_indices = @transform_1, window_bounds = array<i64: 2, 2, 256>}]} {
    %c0 = arith.constant 0 : index
    %c0_0 = arith.constant 0 : index
    %c0_1 = arith.constant 0 : index
    %0 = vector.load %arg2[%c0, %c0_0, %c0_1] : memref<2x4x256xf32, #tpu.memory_space<vmem>>, vector<2x4x256xf32>
    %cst = arith.constant dense<0xFF800000> : vector<2x256xf32>
    %1 = vector.multi_reduction <maximumf>, %0, %cst [1] : vector<2x4x256xf32> to vector<2x256xf32>
    %2 = vector.shape_cast %1 : vector<2x256xf32> to vector<2x1x256xf32>
    %cst_2 = arith.constant dense<0.000000e+00> : vector<2x256xf32>
    %3 = vector.multi_reduction <add>, %0, %cst_2 [1] : vector<2x4x256xf32> to vector<2x256xf32>
    %4 = vector.shape_cast %3 : vector<2x256xf32> to vector<2x1x256xf32>
    %cst_3 = arith.constant 2.500000e-01 : f32
    %5 = vector.broadcast %cst_3 : f32 to vector<2x1x256xf32>
    %6 = arith.mulf %4, %5 : vector<2x1x256xf32>
    %c0_4 = arith.constant 0 : index
    %c0_5 = arith.constant 0 : index
    %c0_6 = arith.constant 0 : index
    %7 = vector.load %arg3[%c0_4, %c0_5, %c0_6] : memref<2x2x256xf32, #tpu.memory_space<vmem>>, vector<2x1x256xf32>
    tpu.vector_store %arg3[%c0_4, %c0_5, %c0_6], %2 {strides = array<i32>} : memref<2x2x256xf32, #tpu.memory_space<vmem>>, vector<2x1x256xf32>,
    %c0_7 = arith.constant 0 : index
    %c1 = arith.constant 1 : index
    %c0_8 = arith.constant 0 : index
    %8 = vector.load %arg3[%c0_7, %c1, %c0_8] : memref<2x2x256xf32, #tpu.memory_space<vmem>>, vector<2x1x256xf32>
    tpu.vector_store %arg3[%c0_7, %c1, %c0_8], %6 {strides = array<i32>} : memref<2x2x256xf32, #tpu.memory_space<vmem>>, vector<2x1x256xf32>,
    return
  }
  func.func @transform_0(%arg0: i32, %arg1: i32) -> (i32, i32, i32) {
    %c0_i32 = arith.constant 0 : i32
    %c0_i32_0 = arith.constant 0 : i32
    return %arg0, %c0_i32, %arg1 : i32, i32, i32
  }
  func.func @transform_1(%arg0: i32, %arg1: i32) -> (i32, i32, i32) {
    %c0_i32 = arith.constant 0 : i32
    %c0_i32_0 = arith.constant 0 : i32
    return %arg0, %c0_i32, %arg1 : i32, i32, i32
  }
}

</mosaic_0001>

<llo_original>
// kernel: tpu_custom_call.1
$region0: #{tpu_custom_call.1}
  #allocation0 [shape = 'u32[]', space=smem, size = 0x4, offset = 0x4, fixed_abs, tag = 'smem constant byte address 0x4 - core index']
  #allocation1 [shape = 'u32[72,128]{1,0:T(1,128)}', space=vmem, size = 0x9000, scoped, tag = 'internal scratch']
  %s0 = inlined_call_operand.hbm [shape: f32[2,4,256], index: 0, kind: input, shape index: {}]
  %s1 = inlined_call_operand.hbm [shape: f32[2,2,256], index: 1, kind: output, shape index: {}]
  %s2 = sld [smem:[#allocation0]]
  $region18: #{tpu_custom_call.1} parent=0
    _
  %s4 = ssub.s32 1, %s2
  %s5 = scalar_select 0, %s4, %s2
  $region1: #{tpu_custom_call.1} parent=0
    #allocation2 [shape = 'u8[8192]{0}', space=vmem, size = 0x2000, scoped, tag = 'input window, operand 0, single buffered']
    #allocation3 [shape = 's32[1]{0}', space=sflag, size = 0x4, scoped, tag = 'scoped memory for tpu_custom_call.1']
    #allocation4 [shape = 's32[1]{0}', space=sflag, size = 0x4, scoped, tag = 'scoped memory for tpu_custom_call.1']
    #allocation5 [shape = 'u8[4096]{0}', space=vmem, size = 0x1000, scoped, tag = 'output window, operand 0, single buffered']
    %6 = vsyncpa [#allocation3], 0
    %7 = vsyncpa [#allocation4], 0
    // Predicated region
    $region2: #{tpu_custom_call.1} parent=1 // pred_check
      _
    $region3: #{tpu_custom_call.1} parent=1 // pred_check_branch
      %9 = sbr.rel (0) target = $region5
    $region4: #{tpu_custom_call.1} parent=1 // pred_region
      %11 = vsyncadd [#allocation3], 0
      %s12 = sshll.u32 %s0, 4
      %s13 = int_to_ptr.hbm [resolvable:$true] %s12
      %s14 = sshll.u32 [#allocation2], 4
      %s15 = int_to_ptr.vmem [resolvable:$true] %s14
      %20 = dma.hbm_to_vmem [thread:$0]  %s13, 256, %s15, [#allocation3], 128, 128, 8
    $region5: #{tpu_custom_call.1} parent=1 // pred_fallthru
      _
    // Predicated region
    $region6: #{tpu_custom_call.1} parent=1 // pred_check
      _
    $region7: #{tpu_custom_call.1} parent=1 // pred_check_branch
      %22 = sbr.rel (0) target = $region9
    $region8: #{tpu_custom_call.1} parent=1 // pred_region
      %24 = dma.done [#allocation3], 256
    $region9: #{tpu_custom_call.1} parent=1 // pred_fallthru
      _
    %v25 = vld [vmem:[#allocation2] sm:$0xff]
    %v26 = vld [vmem:[#allocation2 + $0x8] sm:$0xff]
    %29 = vst [vmem:[#allocation1] ss:$2 sm:$0xff] %v25
    %v30 = vld.sshfl [vmem:[#allocation1] sm:$0xff pattern:$0x75316420]
    %v31 = vld.sshfl [vmem:[#allocation1 + $0x8] sm:$0xff pattern:$0x75316420]
    %s32 = scalar_lea.vmem [#allocation1], 16
    %33 = vst [vmem:[%s32] ss:$2 sm:$0xff] %v26
    %v34 = vld.sshfl [vmem:[#allocation1 + $0x10] sm:$0xff pattern:$0x75316420]
    %v35 = vld.sshfl [vmem:[#allocation1 + $0x18] sm:$0xff pattern:$0x75316420]
    %vm40 = vcmask 1043456
    %v41 = vsel %vm40, %v30, -inf
    %v42 = vrot.slane %v41, 4
    %v43 = vmax.f32 %v41, %v42
    %v44 = vrot.slane %v43, 2
    %v45 = vmax.f32 %v43, %v44
    %v46 = vrot.slane %v45, 1
    %v47 = vmax.f32 %v45, %v46
    %v48 = vsel %vm40, %v31, -inf
    %v49 = vrot.slane %v48, 4
    %v50 = vmax.f32 %v48, %v49
    %v51 = vrot.slane %v50, 2
    %v52 = vmax.f32 %v50, %v51
    %v53 = vrot.slane %v52, 1
    %v54 = vmax.f32 %v52, %v53
    %v55 = vsel %vm40, %v34, -inf
    %v56 = vrot.slane %v55, 4
    %v57 = vmax.f32 %v55, %v56
    %v58 = vrot.slane %v57, 2
    %v59 = vmax.f32 %v57, %v58
    %v60 = vrot.slane %v59, 1
    %v61 = vmax.f32 %v59, %v60
    %v62 = vsel %vm40, %v35, -inf
    %v63 = vrot.slane %v62, 4
    %v64 = vmax.f32 %v62, %v63
    %v65 = vrot.slane %v64, 2
    %v66 = vmax.f32 %v64, %v65
    %v67 = vrot.slane %v66, 1
    %v68 = vmax.f32 %v66, %v67
    %69 = vst [vmem:[#allocation1] ss:$2 sm:$0xff] %v25
    %v70 = vld.sshfl [vmem:[#allocation1] sm:$0xff pattern:$0x75316420]
    %v71 = vld.sshfl [vmem:[#allocation1 + $0x8] sm:$0xff pattern:$0x75316420]
    %s72 = scalar_lea.vmem [#allocation1], 16
    %73 = vst [vmem:[%s72] ss:$2 sm:$0xff] %v26
    %v74 = vld.sshfl [vmem:[#allocation1 + $0x10] sm:$0xff pattern:$0x75316420]
    %v75 = vld.sshfl [vmem:[#allocation1 + $0x18] sm:$0xff pattern:$0x75316420]
    %v80 = vsel %vm40, %v70, 0.0
    %v81 = vrot.slane %v80, 4
    %v82 = vadd.f32 %v80, %v81
    %v83 = vrot.slane %v82, 2
    %v84 = vadd.f32 %v82, %v83
    %v85 = vrot.slane %v84, 1
    %v86 = vadd.f32 %v84, %v85
    %v87 = vsel %vm40, %v71, 0.0
    %v88 = vrot.slane %v87, 4
    %v89 = vadd.f32 %v87, %v88
    %v90 = vrot.slane %v89, 2
    %v91 = vadd.f32 %v89, %v90
    %v92 = vrot.slane %v91, 1
    %v93 = vadd.f32 %v91, %v92
    %v94 = vsel %vm40, %v74, 0.0
    %v95 = vrot.slane %v94, 4
    %v96 = vadd.f32 %v94, %v95
    %v97 = vrot.slane %v96, 2
    %v98 = vadd.f32 %v96, %v97
    %v99 = vrot.slane %v98, 1
    %v100 = vadd.f32 %v98, %v99
    %v101 = vsel %vm40, %v75, 0.0
    %v102 = vrot.slane %v101, 4
    %v103 = vadd.f32 %v101, %v102
    %v104 = vrot.slane %v103, 2
    %v105 = vadd.f32 %v103, %v104
    %v106 = vrot.slane %v105, 1
    %v107 = vadd.f32 %v105, %v106
    %v108 = vmul.f32 %v86, 0.25
    %v109 = vmul.f32 %v93, 0.25
    %v110 = vmul.f32 %v100, 0.25
    %v111 = vmul.f32 %v107, 0.25
    %v116 = vrot.slane %v54, 7
    %v117 = vrot.slane %v68, 7
    %vm118 = vcmask 1040384
    %v119 = vsel %vm118, %v47, %v116
    %v120 = vsel %vm118, %v61, %v117
    %v123 = vlaneseq
    %vm124 = vcmp.ge.s32.totalorder %v123, 0
    %vm125 = vcmp.lt.s32.totalorder %v123, 256
    %vm126 = vmand %vm124, %vm125
    %127 = vst.msk [vmem:[#allocation5] ss:$2 sm:$0x3] %vm126, %v119
    %s128 = scalar_lea.vmem [#allocation5], 4
    %129 = vst.msk [vmem:[%s128] ss:$2 sm:$0x3] %vm126, %v120
    %v134 = vrot.slane %v109, 7
    %v135 = vrot.slane %v111, 7
    %v136 = vsel %vm118, %v108, %v134
    %v137 = vsel %vm118, %v110, %v135
    %s140 = scalar_lea.vmem [#allocation5], 1
    %141 = vst.msk [vmem:[%s140] ss:$2 sm:$0x3] %vm126, %v136
    %s142 = scalar_lea.vmem [#allocation5], 5
    %143 = vst.msk [vmem:[%s142] ss:$2 sm:$0x3] %vm126, %v137
    // Predicated region
    $region10: #{tpu_custom_call.1} parent=1 // pred_check
      _
    $region11: #{tpu_custom_call.1} parent=1 // pred_check_branch
      %145 = sbr.rel (0) target = $region13
    $region12: #{tpu_custom_call.1} parent=1 // pred_region
      %147 = vsyncadd [#allocation4], 0
      %s148 = sshll.u32 [#allocation5], 4
      %s149 = int_to_ptr.vmem [resolvable:$true] %s148
      %s150 = sshll.u32 %s1, 4
      %s151 = int_to_ptr.hbm [resolvable:$true] %s150
      %156 = dma.vmem_to_hbm [thread:$0]  %s149, 128, %s151, [#allocation4], 64, 64, 4
    $region13: #{tpu_custom_call.1} parent=1 // pred_fallthru
      _
    // Predicated region
    $region14: #{tpu_custom_call.1} parent=1 // pred_check
      _
    $region15: #{tpu_custom_call.1} parent=1 // pred_check_branch
      %158 = sbr.rel (0) target = $region17
    $region16: #{tpu_custom_call.1} parent=1 // pred_region
      %160 = dma.done [#allocation4], 128
    $region17: #{tpu_custom_call.1} parent=1 // pred_fallthru
      _
    %161 = vsyncpa [#allocation3], 1
    %162 = vsyncpa [#allocation4], 1

</llo_original>
